<compile_context>
chip_gen: v7x
topology: tpu7x:2x2x1
jax: 0.10.0
libtpu: 0.0.40
codegen_flags: <defaults>
</compile_context>

<pallas_src>
import math

import jax
import jax.numpy as jnp
import numpy as np
from jax.experimental import pallas as pl
from jax.experimental.pallas import tpu as pltpu


def cond_conv_kernel(kt_ref, bias_ref, x_ref, out_ref):
    # kt_ref  : (TB, C, C)    -- kt[b, j, i] = K[b, i, j] (precomputed in JAX)
    # bias_ref: (TB, C, 1)
    # x_ref   : (TB, C, WHp)  -- NCHW input, spatial flattened & lane-padded
    # out_ref : (TB, C, WHp)
    kt = kt_ref[...].astype(jnp.float32)
    x = x_ref[...].astype(jnp.float32)
    bias = bias_ref[...].astype(jnp.float32)

    # out[b, j, p] = sum_i kt[b, j, i] * x[b, i, p]
    out = jnp.einsum("bji,bip->bjp", kt, x,
                     preferred_element_type=jnp.float32)
    out = out + bias                                   # broadcast bias (VPU)
    out_ref[...] = out.astype(out_ref.dtype)


def conditional_conv(x, condition, wk, wb, *, target_block_bytes=2 << 20):
    """x: (bs, C, H, W) NCHW; condition: (bs, NC); wk: (C*C, NC); wb: (C, NC)."""
    bs, c, h, w = x.shape
    wh = h * w
    whp = ((wh + 127) // 128) * 128                    # lane-dense output

    x_flat = x.reshape(bs, c, wh)
    if whp != wh:
        x_flat = jnp.pad(x_flat, ((0, 0), (0, 0), (0, whp - wh)))

    # Hoisted conditional-kernel / bias computation (one big MXU-friendly matmul
    # in plain JAX, not bs tiny matmuls inside the kernel).
    f32 = jnp.float32
    ck = jnp.dot(condition.astype(f32), wk.astype(f32).T).reshape(bs, c, c)  # [b,i,j]
    kt = jnp.transpose(ck, (0, 2, 1))                                        # [b,j,i]
    bias = jnp.dot(condition.astype(f32), wb.astype(f32).T)[:, :, None]      # (bs,c,1)

    # Batch elements per grid step: aim for ~target_block_bytes per x block,
    # keep bs % tb == 0, and keep >= 2 grid steps when bs >= 2 (v7x has 2 TCs).
    bytes_per_batch = c * whp * x.dtype.itemsize
    tb = max(1, min(bs, target_block_bytes // max(1, bytes_per_batch)))
    while tb > 1 and (bs % tb != 0 or (bs >= 2 and bs // tb < 2)):
        tb -= 1
    grid = (bs // tb,)

    out = pl.pallas_call(
        cond_conv_kernel,
        out_shape=jax.ShapeDtypeStruct((bs, c, whp), x.dtype),
        grid=grid,
        in_specs=[
            pl.BlockSpec((tb, c, c), lambda b: (b, 0, 0)),
            pl.BlockSpec((tb, c, 1), lambda b: (b, 0, 0)),
            pl.BlockSpec((tb, c, whp), lambda b: (b, 0, 0)),
        ],
        out_specs=pl.BlockSpec((tb, c, whp), lambda b: (b, 0, 0)),
        compiler_params=pltpu.CompilerParams(
            dimension_semantics=("parallel",)),
    )(kt, bias, x_flat)

    out = out[:, :, :wh].reshape(bs, c, h, w)
    return out


def reference(x, condition, wk, wb):
    """Pure-JAX replica of the PyTorch forward for validation."""
    bs, c, h, w = x.shape
    ck = (condition @ wk.T).reshape(bs, c, c)                      # (bs, c, c)
    cb = condition @ wb.T                                          # (bs, c)
    xf = x.reshape(bs, c, h * w)                                   # (bs, c, wh)
    out = jnp.matmul(jnp.transpose(xf, (0, 2, 1)), ck)             # (bs, wh, c)
    out = jnp.transpose(out, (0, 2, 1)).reshape(bs, c, h, w)
    return out + cb[:, :, None, None]


def xavier_uniform(key, shape):
    fan_out, fan_in = shape
    bound = math.sqrt(6.0 / (fan_in + fan_out))
    return jax.random.uniform(key, shape, jnp.float32, -bound, bound)


if __name__ == "__main__":
    # Small shapes consistent with the module: batch=2, channels=4, spatial=16,
    # number_of_classes=10.
    bs, c, spatial, nc = 2, 4, 16, 10

    key = jax.random.PRNGKey(0)
    k_x, k_cond, k_wk, k_wb = jax.random.split(key, 4)

    x = jax.random.normal(k_x, (bs, c, spatial, spatial), jnp.float32)
    condition = jax.random.normal(k_cond, (bs, nc), jnp.float32)

    # Parameters (deterministic, Xavier-uniform like nn.init.xavier_uniform_):
    wk = xavier_uniform(k_wk, (c * c, nc))   # linearkernel.weight
    wb = xavier_uniform(k_wb, (c, nc))       # linearbias.weight

    out = conditional_conv(x, condition, wk, wb)
    out = jax.block_until_ready(out)

    ref = jax.block_until_ready(reference(x, condition, wk, wb))
    np.testing.assert_allclose(np.asarray(out), np.asarray(ref),
                               rtol=1e-5, atol=1e-5)

    print("KERNEL_OK")
</pallas_src>

<mosaic_0001>
module attributes {stable_mosaic.version = 11 : i64} {
  func.func @cond_conv_kernel(%arg0: i32, %arg1: memref<1x4x4xf32, #tpu.memory_space<vmem>>, %arg2: memref<1x4x1xf32, #tpu.memory_space<vmem>>, %arg3: memref<1x4x256xf32, #tpu.memory_space<vmem>>, %arg4: memref<1x4x256xf32, #tpu.memory_space<vmem>>) attributes {dimension_semantics = [#tpu.dimension_semantics<parallel>], iteration_bounds = array<i64: 2>, scalar_prefetch = 0 : i64, scratch_operands = 0 : i64, tpu.core_type = #tpu.core_type<tc>, window_params = [{transform_indices = @transform_0, window_bounds = array<i64: 1, 4, 4>}, {transform_indices = @transform_1, window_bounds = array<i64: 1, 4, 1>}, {transform_indices = @transform_2, window_bounds = array<i64: 1, 4, 256>}, {transform_indices = @transform_3, window_bounds = array<i64: 1, 4, 256>}]} {
    %c0 = arith.constant 0 : index
    %c0_0 = arith.constant 0 : index
    %c0_1 = arith.constant 0 : index
    %0 = vector.load %arg1[%c0, %c0_0, %c0_1] : memref<1x4x4xf32, #tpu.memory_space<vmem>>, vector<1x4x4xf32>
    %c0_2 = arith.constant 0 : index
    %c0_3 = arith.constant 0 : index
    %c0_4 = arith.constant 0 : index
    %1 = vector.load %arg3[%c0_2, %c0_3, %c0_4] : memref<1x4x256xf32, #tpu.memory_space<vmem>>, vector<1x4x256xf32>
    %c0_5 = arith.constant 0 : index
    %c0_6 = arith.constant 0 : index
    %c0_7 = arith.constant 0 : index
    %2 = vector.load %arg2[%c0_5, %c0_6, %c0_7] : memref<1x4x1xf32, #tpu.memory_space<vmem>>, vector<1x4x1xf32>
    "tpu.trace_start"() <{level = 10 : i32, message = "bji,bip->bjp"}> : () -> ()
    %cst = arith.constant dense<0.000000e+00> : vector<1x4x256xf32>
    %3 = tpu.matmul %0, %1, %cst {dimension_numbers = #tpu.dot_dimension_numbers<[2], [1], [1], [2], [0, 0, 0, 1, 1, 2], [0], [0]>} : vector<1x4x4xf32>, vector<1x4x256xf32>, vector<1x4x256xf32> -> vector<1x4x256xf32>
    "tpu.trace_stop"() : () -> ()
    %4 = vector.broadcast %2 : vector<1x4x1xf32> to vector<1x4x256xf32>
    %5 = arith.addf %3, %4 : vector<1x4x256xf32>
    %c0_8 = arith.constant 0 : index
    %c0_9 = arith.constant 0 : index
    %c0_10 = arith.constant 0 : index
    %6 = vector.load %arg4[%c0_8, %c0_9, %c0_10] : memref<1x4x256xf32, #tpu.memory_space<vmem>>, vector<1x4x256xf32>
    tpu.vector_store %arg4[%c0_8, %c0_9, %c0_10], %5 {strides = array<i32>} : memref<1x4x256xf32, #tpu.memory_space<vmem>>, vector<1x4x256xf32>,
    return
  }
  func.func @transform_0(%arg0: i32) -> (i32, i32, i32) {
    %c0_i32 = arith.constant 0 : i32
    %c0_i32_0 = arith.constant 0 : i32
    %c0_i32_1 = arith.constant 0 : i32
    return %arg0, %c0_i32, %c0_i32_0 : i32, i32, i32
  }
  func.func @transform_1(%arg0: i32) -> (i32, i32, i32) {
    %c0_i32 = arith.constant 0 : i32
    %c0_i32_0 = arith.constant 0 : i32
    %c0_i32_1 = arith.constant 0 : i32
    return %arg0, %c0_i32, %c0_i32_0 : i32, i32, i32
  }
  func.func @transform_2(%arg0: i32) -> (i32, i32, i32) {
    %c0_i32 = arith.constant 0 : i32
    %c0_i32_0 = arith.constant 0 : i32
    %c0_i32_1 = arith.constant 0 : i32
    return %arg0, %c0_i32, %c0_i32_0 : i32, i32, i32
  }
  func.func @transform_3(%arg0: i32) -> (i32, i32, i32) {
    %c0_i32 = arith.constant 0 : i32
    %c0_i32_0 = arith.constant 0 : i32
    %c0_i32_1 = arith.constant 0 : i32
    return %arg0, %c0_i32, %c0_i32_0 : i32, i32, i32
  }
}

</mosaic_0001>

<llo_original>
// kernel: tpu_custom_call.1
$region0: #{tpu_custom_call.1}
  #allocation0 [shape = 'u32[]', space=smem, size = 0x4, offset = 0x4, fixed_abs, tag = 'smem constant byte address 0x4 - core index']
  #allocation1 [shape = 'u32[144,128]{1,0:T(1,128)}', space=vmem, size = 0x12000, scoped, tag = 'internal scratch']
  %s0 = inlined_call_operand.hbm [shape: f32[2,4,4], index: 0, kind: input, shape index: {}]
  %s1 = inlined_call_operand.vmem [shape: f32[2,4,1], index: 1, kind: input, shape index: {}]
  %s2 = inlined_call_operand.vmem [shape: f32[2,4,256], index: 2, kind: input, shape index: {}]
  %s3 = inlined_call_operand.hbm [shape: f32[2,4,256], index: 3, kind: output, shape index: {}]
  %s4 = sld [smem:[#allocation0]]
  $region49: #{tpu_custom_call.1} parent=0
    _
  %s6 = ssub.s32 1, %s4
  %s7 = scalar_select 0, %s6, %s4
  $region1: #{tpu_custom_call.1} parent=0
    #allocation2 [shape = 'u8[4096]{0}', space=vmem, size = 0x1000, scoped, tag = 'input window, operand 0']
    #allocation3 [shape = 's32[2]{0}', space=sflag, size = 0x8, scoped, tag = 'scoped memory for tpu_custom_call.1']
    #allocation4 [shape = 's32[2]{0}', space=sflag, size = 0x8, scoped, tag = 'scoped memory for tpu_custom_call.1']
    #allocation5 [shape = 'u8[8192]{0}', space=vmem, size = 0x2000, scoped, tag = 'output window, operand 0']
    %8 = vsyncpa [#allocation3], 0
    %s9 = scalar_lea.sflag [#allocation3], 1
    %10 = vsyncpa %s9, 0
    %11 = vsyncpa [#allocation4], 0
    %s12 = scalar_lea.sflag [#allocation4], 1
    %13 = vsyncpa %s12, 0
    loop: start=0, step=1, limit=4
    $region2: #{tpu_custom_call.1} parent=1 // loop_pre_header
      _
    $region3: #{tpu_custom_call.1} parent=1 // loop_header
      %s15 = sphi 0, %s19
      %p16 = scmp.ge.s32.totalorder %s15, 4
      %s25 = sphi 0, %s27
      %s28 = sphi 0, %s25
      %s29 = sphi 0, %s28
      %s45 = sphi 0, %s29
      %s51 = sphi 0, %s53
      %s54 = sphi 0, %s51
      %s55 = sphi 0, %s54
      %s71 = sphi 0, %s55
      %s77 = sphi 0, %s79
      %s80 = sphi 0, %s77
      %s81 = sphi 0, %s80
      %s97 = sphi 0, %s81
      %s103 = sphi 0, %s105
      %s106 = sphi 0, %s103
      %s107 = sphi 0, %s106
      %s123 = sphi 0, %s107
    $region4: #{tpu_custom_call.1} parent=1 // loop_header_branch
      %18 = sbr.rel (%p16) target = $region8
    $region5: #{tpu_custom_call.1} parent=1 // loop_body
      %s20 = ssub.s32 %s15, 1
      %s21 = ssub.s32 %s15, 2
      %s22 = sadd.s32 %s15, 1
      %s23 = ssub.s32 %s15, %s22
      %p24 = scmp.eq.s32.totalorder %s23, 0
      %s26 = sadd.s32 %s25, 1
      %s27 = scalar_select %p24, %s25, %s26
      %p30 = pneg %p24
      %p31 = scmp.eq.s32.totalorder %s15, 1
      %p32 = por %p30, %p31
      %p33 = scmp.ne.s32.totalorder %s25, %s28
      %p34 = scmp.eq.s32.totalorder %s15, 0
      %p35 = por %p33, %p34
      %p36 = scmp.ne.s32.totalorder %s25, %s28
      %p37 = scmp.eq.s32.totalorder %s20, 1
      %p38 = por %p36, %p37
      %p39 = scmp.ne.s32.totalorder %s28, %s29
      %p40 = scmp.eq.s32.totalorder %s20, 0
      %p41 = por %p39, %p40
      %p42 = scmp.ne.s32.totalorder %s28, %s29
      %p43 = scmp.eq.s32.totalorder %s21, 1
      %p44 = por %p42, %p43
      %p46 = scmp.ne.s32.totalorder %s29, %s45
      %p47 = scmp.eq.s32.totalorder %s21, 0
      %p48 = por %p46, %p47
      %s49 = ssub.s32 %s15, %s22
      %p50 = scmp.eq.s32.totalorder %s49, 0
      %s52 = sadd.s32 %s51, 1
      %s53 = scalar_select %p50, %s51, %s52
      %p56 = pneg %p50
      %p57 = scmp.eq.s32.totalorder %s15, 1
      %p58 = por %p56, %p57
      %p59 = scmp.ne.s32.totalorder %s51, %s54
      %p60 = scmp.eq.s32.totalorder %s15, 0
      %p61 = por %p59, %p60
      %p62 = scmp.ne.s32.totalorder %s51, %s54
      %p63 = scmp.eq.s32.totalorder %s20, 1
      %p64 = por %p62, %p63
      %p65 = scmp.ne.s32.totalorder %s54, %s55
      %p66 = scmp.eq.s32.totalorder %s20, 0
      %p67 = por %p65, %p66
      %p68 = scmp.ne.s32.totalorder %s54, %s55
      %p69 = scmp.eq.s32.totalorder %s21, 1
      %p70 = por %p68, %p69
      %p72 = scmp.ne.s32.totalorder %s55, %s71
      %p73 = scmp.eq.s32.totalorder %s21, 0
      %p74 = por %p72, %p73
      %s75 = ssub.s32 %s15, %s22
      %p76 = scmp.eq.s32.totalorder %s75, 0
      %s78 = sadd.s32 %s77, 1
      %s79 = scalar_select %p76, %s77, %s78
      %p82 = pneg %p76
      %p83 = scmp.eq.s32.totalorder %s15, 1
      %p84 = por %p82, %p83
      %p85 = scmp.ne.s32.totalorder %s77, %s80
      %p86 = scmp.eq.s32.totalorder %s15, 0
      %p87 = por %p85, %p86
      %p88 = scmp.ne.s32.totalorder %s77, %s80
      %p89 = scmp.eq.s32.totalorder %s20, 1
      %p90 = por %p88, %p89
      %p91 = scmp.ne.s32.totalorder %s80, %s81
      %p92 = scmp.eq.s32.totalorder %s20, 0
      %p93 = por %p91, %p92
      %p94 = scmp.ne.s32.totalorder %s80, %s81
      %p95 = scmp.eq.s32.totalorder %s21, 1
      %p96 = por %p94, %p95
      %p98 = scmp.ne.s32.totalorder %s81, %s97
      %p99 = scmp.eq.s32.totalorder %s21, 0
      %p100 = por %p98, %p99
      %s101 = ssub.s32 %s15, %s22
      %p102 = scmp.eq.s32.totalorder %s101, 0
      %s104 = sadd.s32 %s103, 1
      %s105 = scalar_select %p102, %s103, %s104
      %p108 = pneg %p102
      %p109 = scmp.eq.s32.totalorder %s15, 1
      %p110 = por %p108, %p109
      %p111 = scmp.ne.s32.totalorder %s103, %s106
      %p112 = scmp.eq.s32.totalorder %s15, 0
      %p113 = por %p111, %p112
      %p114 = scmp.ne.s32.totalorder %s103, %s106
      %p115 = scmp.eq.s32.totalorder %s20, 1
      %p116 = por %p114, %p115
      %p117 = scmp.ne.s32.totalorder %s106, %s107
      %p118 = scmp.eq.s32.totalorder %s20, 0
      %p119 = por %p117, %p118
      %p120 = scmp.ne.s32.totalorder %s106, %s107
      %p121 = scmp.eq.s32.totalorder %s21, 1
      %p122 = por %p120, %p121
      %p124 = scmp.ne.s32.totalorder %s107, %s123
      %p125 = scmp.eq.s32.totalorder %s21, 0
      %p126 = por %p124, %p125
      %p127 = scmp.le.s32.totalorder 1, %s15
      %p128 = scmp.lt.s32.totalorder %s15, 3
      %p129 = pnand %p127, %p128
      %p130 = pneg %p129
      // Predicated region
      $region9: #{tpu_custom_call.1} parent=5 // pred_check
        _
      $region10: #{tpu_custom_call.1} parent=5 // pred_check_branch
        %132 = sbr.rel (%p129) target = $region12
      $region11: #{tpu_custom_call.1} parent=5 // pred_region
        %s133 = ssub.s32 %s15, 1
      $region12: #{tpu_custom_call.1} parent=5 // pred_fallthru
        _
      %p134 = scmp.lt.s32.totalorder %s15, 2
      // Predicated region
      $region13: #{tpu_custom_call.1} parent=5 // pred_check
        %p135 = pneg %p134
      $region14: #{tpu_custom_call.1} parent=5 // pred_check_branch
        %137 = sbr.rel (%p135) target = $region16
      $region15: #{tpu_custom_call.1} parent=5 // pred_region
        // Predicated region
        $region17: #{tpu_custom_call.1} parent=15 // pred_check
          %p138 = pneg %p35
        $region18: #{tpu_custom_call.1} parent=15 // pred_check_branch
          %140 = sbr.rel (%p138) target = $region20
        $region19: #{tpu_custom_call.1} parent=15 // pred_region
          %s141 = sand.u32 %s25, 1
          %s142 = scalar_lea.sflag [#allocation3], %s141
          %s143 = sand.u32 %s25, 1
          %s144 = smul.addr %s143, 4
          %s145 = scalar_lea.vmem [#allocation2], %s144
          %s147 = ssub.s32 64, 64
          %148 = vsyncadd %s142, %s147
          %s149 = smul.addr %s15, 64
          %s150 = scalar_lea.hbm %s0, %s149
          %s152 = sshll.u32 %s145, 4
          %s153 = int_to_ptr.vmem [resolvable:$true] %s152
          %155 = dma.hbm_to_vmem [thread:$0]  %s150, 64, %s153, %s142
        $region20: #{tpu_custom_call.1} parent=15 // pred_fallthru
          _
        // Predicated region
        $region21: #{tpu_custom_call.1} parent=15 // pred_check
          %p156 = pneg %p61
        $region22: #{tpu_custom_call.1} parent=15 // pred_check_branch
          %158 = sbr.rel (%p156) target = $region24
        $region23: #{tpu_custom_call.1} parent=15 // pred_region
          %p159 = scmp.lt.s32.totalorder %s15, 1
          %s160 = scalar_select %p159, %s15, 1
          %s161 = smul.addr %s160, 4
          %s162 = scalar_lea.vmem %s1, %s161
        $region24: #{tpu_custom_call.1} parent=15 // pred_fallthru
          _
        // Predicated region
        $region25: #{tpu_custom_call.1} parent=15 // pred_check
          %p163 = pneg %p87
        $region26: #{tpu_custom_call.1} parent=15 // pred_check_branch
          %165 = sbr.rel (%p163) target = $region28
        $region27: #{tpu_custom_call.1} parent=15 // pred_region
          %p166 = scmp.lt.s32.totalorder %s15, 1
          %s167 = scalar_select %p166, %s15, 1
          %s168 = smul.addr %s167, 2
          %s169 = smul.addr %s168, 4
          %s170 = scalar_lea.vmem %s2, %s169
        $region28: #{tpu_custom_call.1} parent=15 // pred_fallthru
          _
      $region16: #{tpu_custom_call.1} parent=5 // pred_fallthru
        _
      %p171 = scmp.le.s32.totalorder 1, %s15
      %p172 = scmp.lt.s32.totalorder %s15, 3
      %p173 = pnand %p171, %p172
      %p174 = pneg %p173
      // Predicated region
      $region29: #{tpu_custom_call.1} parent=5 // pred_check
        _
      $region30: #{tpu_custom_call.1} parent=5 // pred_check_branch
        %176 = sbr.rel (%p173) target = $region32
      $region31: #{tpu_custom_call.1} parent=5 // pred_region
        %s177 = ssub.s32 %s15, 1
        %s178 = sand.u32 %s28, 1
        %s179 = scalar_lea.sflag [#allocation3], %s178
        %s180 = sand.u32 %s28, 1
        %s181 = smul.addr %s180, 4
        %s182 = scalar_lea.vmem [#allocation2], %s181
        // Predicated region
        $region33: #{tpu_custom_call.1} parent=31 // pred_check
          %p183 = pneg %p41
        $region34: #{tpu_custom_call.1} parent=31 // pred_check_branch
          %185 = sbr.rel (%p183) target = $region36
        $region35: #{tpu_custom_call.1} parent=31 // pred_region
          %186 = dma.done %s179, 64
        $region36: #{tpu_custom_call.1} parent=31 // pred_fallthru
          _
        %s187 = sand.u32 %s28, 1
        %s188 = scalar_lea.sflag [#allocation3], %s187
        %s189 = sand.u32 %s28, 1
        %s190 = smul.addr %s189, 4
        %s191 = scalar_lea.vmem [#allocation2], %s190
        %p192 = pneg %p41
        %p193 = pneg %p38
        %p194 = scmp.lt.s32.totalorder %s20, 1
        %s195 = scalar_select %p194, %s20, 1
        %s196 = smul.addr %s195, 4
        %s197 = scalar_lea.vmem %s1, %s196
        %p198 = pneg %p67
        %p199 = pneg %p64
        %p200 = scmp.lt.s32.totalorder %s20, 1
        %s201 = scalar_select %p200, %s20, 1
        %s202 = smul.addr %s201, 2
        %s203 = smul.addr %s202, 4
        %s204 = scalar_lea.vmem %s2, %s203
        %p205 = pneg %p93
        %p206 = pneg %p90
        %p207 = pneg %p119
        %p208 = pneg %p116
        %s209 = sand.u32 %s106, 1
        %s210 = scalar_lea.sflag [#allocation4], %s209
        %s211 = sand.u32 %s106, 1
        %s212 = smul.addr %s211, 8
        %s213 = scalar_lea.vmem [#allocation5], %s212
        %p214 = scmp.lt.s32.totalorder %s20, 1
        %s215 = scalar_select %p214, %s20, 1
        %s216 = smul.addr %s215, 4
        %s217 = scalar_lea.vmem %s1, %s216
        %p218 = scmp.lt.s32.totalorder %s20, 1
        %s219 = scalar_select %p218, %s20, 1
        %s220 = smul.addr %s219, 2
        %s221 = smul.addr %s220, 4
        %s222 = scalar_lea.vmem %s2, %s221
        %v223 = vld [vmem:[%s182] sm:$0xf]
        %v224 = vld [vmem:[%s222] sm:$0xff]
        %v225 = vld [vmem:[%s217] sm:$0xf]
        %227 = vset.pattern.permute.xlu0 0
        %228 = vperm.xlu0 %227, %v225
        %v229 = vpop.permute.xlu0 %228
        %v232 = vcombine.high %v224, %v224
        %vm233 = vcmask 31744
        %v235 = vsel %vm233, %v223, 0
        %vm237 = vcmask 1043456
        %v238 = vsel %vm237, %v224, 0
        %v240 = vsel %vm237, %v232, 0
        %242 = vmatprep.subr.mxu0 %v240
        %243 = vmatpush1.msra.mxu0 %v238
        %244 = vmatprep.subr.mxu0 0.0
        %245 = vmatpush1.msra.mxu0 0.0
        %246 = vmatprep.subr.mxu0 0.0
        %247 = vmatpush1.msra.mxu0 0.0
        %248 = vmatprep.subr.mxu0 0.0
        %249 = vmatpush1.msra.mxu0 0.0
        %250 = vmatprep.subr.mxu0 0.0
        %251 = vmatpush1.msra.mxu0 0.0
        %252 = vmatprep.subr.mxu0 0.0
        %253 = vmatpush1.msra.mxu0 0.0
        %254 = vmatprep.subr.mxu0 0.0
        %255 = vmatpush1.msra.mxu0 0.0
        %256 = vmatprep.subr.mxu0 0.0
        %257 = vmatpush1.msra.mxu0 0.0
        %258 = vmatprep.subr.mxu0 0.0
        %259 = vmatpush1.msra.mxu0 0.0
        %260 = vmatprep.subr.mxu0 0.0
        %261 = vmatpush1.msra.mxu0 0.0
        %262 = vmatprep.subr.mxu0 0.0
        %263 = vmatpush1.msra.mxu0 0.0
        %264 = vmatprep.subr.mxu0 0.0
        %265 = vmatpush1.msra.mxu0 0.0
        %266 = vmatprep.subr.mxu0 0.0
        %267 = vmatpush1.msra.mxu0 0.0
        %268 = vmatprep.subr.mxu0 0.0
        %269 = vmatpush1.msra.mxu0 0.0
        %270 = vmatprep.subr.mxu0 0.0
        %271 = vmatpush1.msra.mxu0 0.0
        %272 = vmatprep.subr.mxu0 0.0
        %273 = vmatpush1.msra.mxu0 0.0
        %274 = vmatprep.subr.mxu0 0.0
        %275 = vmatpush1.msra.mxu0 0.0
        %276 = vmatprep.subr.mxu0 0.0
        %277 = vmatpush1.msra.mxu0 0.0
        %278 = vmatprep.subr.mxu0 0.0
        %279 = vmatpush1.msra.mxu0 0.0
        %280 = vmatprep.subr.mxu0 0.0
        %281 = vmatpush1.msra.mxu0 0.0
        %282 = vmatprep.subr.mxu0 0.0
        %283 = vmatpush1.msra.mxu0 0.0
        %284 = vmatprep.subr.mxu0 0.0
        %285 = vmatpush1.msra.mxu0 0.0
        %286 = vmatprep.subr.mxu0 0.0
        %287 = vmatpush1.msra.mxu0 0.0
        %288 = vmatprep.subr.mxu0 0.0
        %289 = vmatpush1.msra.mxu0 0.0
        %290 = vmatprep.subr.mxu0 0.0
        %291 = vmatpush1.msra.mxu0 0.0
        %292 = vmatprep.subr.mxu0 0.0
        %293 = vmatpush1.msra.mxu0 0.0
        %294 = vmatprep.subr.mxu0 0.0
        %295 = vmatpush1.msra.mxu0 0.0
        %296 = vmatprep.subr.mxu0 0.0
        %297 = vmatpush1.msra.mxu0 0.0
        %298 = vmatprep.subr.mxu0 0.0
        %299 = vmatpush1.msra.mxu0 0.0
        %300 = vmatprep.subr.mxu0 0.0
        %301 = vmatpush1.msra.mxu0 0.0
        %302 = vmatprep.subr.mxu0 0.0
        %303 = vmatpush1.msra.mxu0 0.0
        %304 = vmatprep.subr.mxu0 0.0
        %305 = vmatpush1.msra.mxu0 0.0
        %306 = vmatprep.mubr.f32.mxu0 0.0
        %307 = vmatmul.mubr.f32.gmra.mrb[0].mxu0 %v235
        %v308 = vpop.f32.mrb[0].mxu0
        %v309 = vadd.f32 %v229, %v308
        %v310 = vpop.f32.mrb[0].mxu0
        %v311 = vadd.f32 %v229, %v310
        %312 = vdwg.mxu0
        %v315 = vcombine.low %v309, %v311
        %317 = vst [vmem:[%s213] sm:$0xff] %v315
        %s318 = sand.u32 %s106, 1
        %s319 = scalar_lea.sflag [#allocation4], %s318
        %s320 = sand.u32 %s106, 1
        %s321 = smul.addr %s320, 8
        %s322 = scalar_lea.vmem [#allocation5], %s321
        // Predicated region
        $region37: #{tpu_custom_call.1} parent=31 // pred_check
          %p323 = pneg %p116
        $region38: #{tpu_custom_call.1} parent=31 // pred_check_branch
          %325 = sbr.rel (%p323) target = $region40
        $region39: #{tpu_custom_call.1} parent=31 // pred_region
          %s327 = ssub.s32 128, 128
          %328 = vsyncadd %s319, %s327
          %s329 = smul.addr %s20, 2
          %s330 = smul.addr %s329, 64
          %s331 = scalar_lea.hbm %s3, %s330
          %s333 = sshll.u32 %s322, 4
          %s334 = int_to_ptr.vmem [resolvable:$true] %s333
          %336 = dma.vmem_to_hbm [thread:$0]  %s334, 128, %s331, %s319
        $region40: #{tpu_custom_call.1} parent=31 // pred_fallthru
          _
      $region32: #{tpu_custom_call.1} parent=5 // pred_fallthru
        _
      %p337 = scmp.le.s32.totalorder 2, %s15
      // Predicated region
      $region41: #{tpu_custom_call.1} parent=5 // pred_check
        %p338 = pneg %p337
      $region42: #{tpu_custom_call.1} parent=5 // pred_check_branch
        %340 = sbr.rel (%p338) target = $region44
      $region43: #{tpu_custom_call.1} parent=5 // pred_region
        %s341 = ssub.s32 %s15, 2
        // Predicated region
        $region45: #{tpu_custom_call.1} parent=43 // pred_check
          %p342 = pneg %p122
        $region46: #{tpu_custom_call.1} parent=43 // pred_check_branch
          %344 = sbr.rel (%p342) target = $region48
        $region47: #{tpu_custom_call.1} parent=43 // pred_region
          %s345 = sand.u32 %s107, 1
          %s346 = scalar_lea.sflag [#allocation4], %s345
          %s347 = sand.u32 %s107, 1
          %s348 = smul.addr %s347, 8
          %s349 = scalar_lea.vmem [#allocation5], %s348
          %350 = dma.done %s346, 128
        $region48: #{tpu_custom_call.1} parent=43 // pred_fallthru
          _
      $region44: #{tpu_custom_call.1} parent=5 // pred_fallthru
        _
    $region6: #{tpu_custom_call.1} parent=1 // loop_footer
      %s19 = sadd.s32 1, %s15
    $region7: #{tpu_custom_call.1} parent=1 // loop_footer_branch
      %14 = sbr.rel target = $region3
    $region8: #{tpu_custom_call.1} parent=1 // loop_exit
      _
    %351 = vsyncpa [#allocation3], 1
    %s352 = scalar_lea.sflag [#allocation3], 1
    %353 = vsyncpa %s352, 1
    %354 = vsyncpa [#allocation4], 1
    %s355 = scalar_lea.sflag [#allocation4], 1
    %356 = vsyncpa %s355, 1

</llo_original>
